<compile_context>
chip_gen: v6e
topology: v6e:2x2x1
jax: 0.10.0
libtpu: 0.0.40
codegen_flags: <defaults>
</compile_context>

<pallas_src>
import functools
import math

import jax
import jax.numpy as jnp
from jax import lax
from jax.experimental import pallas as pl
from jax.experimental.pallas import tpu as pltpu

_MAX_TOKEN_BLOCK = 512  # tokens per grid step (multiple of 8 sublanes)


def _round_up(x, m):
    return ((x + m - 1) // m) * m


def _keep_mask(shape, seed_i32, base_row_i32, threshold):
    """Counter-based uniform bits -> boolean keep mask (pure jnp integer ops)."""
    d = shape[-1]
    rows = lax.broadcasted_iota(jnp.int32, shape, 0) + base_row_i32
    cols = lax.broadcasted_iota(jnp.int32, shape, 1)
    x = (rows * d + cols).astype(jnp.uint32)          # global element index
    x = x ^ (seed_i32.astype(jnp.uint32) * jnp.uint32(0x9E3779B9))
    # murmur3 fmix32 finalizer (good avalanche for sequential counters)
    x = x ^ (x >> 16)
    x = x * jnp.uint32(0x85EBCA6B)
    x = x ^ (x >> 13)
    x = x * jnp.uint32(0xC2B2AE35)
    x = x ^ (x >> 16)
    return x >= jnp.uint32(threshold)                  # keep prob ~= 1 - p


def _embed_dropout_kernel(seed_ref, ids_ref, table_ref, out_ref, *,
                          p, training, vocab):
    """One grid step: gather TB embedding rows + (optional) dropout.

    seed_ref : SMEM (1,)    int32   (scalar-prefetched dropout seed)
    ids_ref  : VMEM (TB, 1) int32   (per-block token ids)
    table_ref: VMEM (V, D)  float32 (full embedding table, constant index_map)
    out_ref  : VMEM (TB, D) float32
    """
    tb = ids_ref.shape[0]

    # ---- embedding gather: one-hot @ table on the MXU (vectorized) --------
    # ids outside [0, V) yield an all-zero row instead of an OOB VMEM read.
    ids = ids_ref[...]                                                # (TB, 1)
    onehot = ids == lax.broadcasted_iota(jnp.int32, (tb, vocab), 1)   # (TB, V)
    emb = jnp.dot(onehot.astype(table_ref.dtype), table_ref[...],
                  preferred_element_type=jnp.float32)                 # (TB, D)

    # ---- dropout (training mode only) --------------------------------------
    if training and p > 0.0:
        if p >= 1.0:
            emb = jnp.zeros_like(emb)
        else:
            threshold = min(int(round(p * 2.0 ** 32)), 2 ** 32 - 1)
            base_row = pl.program_id(0) * tb
            keep = _keep_mask(emb.shape, seed_ref[0], base_row, threshold)
            scale = 1.0 / (1.0 - p)
            emb = emb * (keep.astype(jnp.float32) * jnp.float32(scale))

    out_ref[...] = emb.astype(out_ref.dtype)


def embedding_with_dropout(ids, table, *, p, training, seed=0):
    """ids: int array of any shape, table: (V, D) -> ids.shape + (D,)."""
    V, D = table.shape
    lead_shape = ids.shape
    n = int(math.prod(lead_shape))
    ids_flat = ids.reshape(n, 1).astype(jnp.int32)

    # Large token blocks (amortize ~0.35us/step), padded to a sublane multiple.
    tb = min(_MAX_TOKEN_BLOCK, _round_up(n, 8))
    n_pad = _round_up(n, tb)
    if n_pad != n:
        ids_flat = jnp.pad(ids_flat, ((0, n_pad - n), (0, 0)))

    seed_arr = jnp.asarray([seed], dtype=jnp.int32)
    kernel = functools.partial(_embed_dropout_kernel,
                               p=float(p), training=bool(training), vocab=V)

    out = pl.pallas_call(
        kernel,
        out_shape=jax.ShapeDtypeStruct((n_pad, D), table.dtype),
        grid_spec=pltpu.PrefetchScalarGridSpec(
            num_scalar_prefetch=1,                 # only the seed goes to SMEM
            grid=(n_pad // tb,),
            in_specs=[
                # per-step ids block (no whole-array SMEM prefetch)
                pl.BlockSpec((tb, 1), lambda i, seed: (i, 0)),
                # full table resident in VMEM; constant index_map so the
                # pipeliner does not re-DMA it between steps.
                # TODO(synk): for large vocab (v7x: 64 MiB VMEM) keep the table
                # in HBM (memory_space=pl.ANY) and DMA-gather rows manually.
                pl.BlockSpec((V, D), lambda i, seed: (0, 0)),
            ],
            out_specs=pl.BlockSpec((tb, D), lambda i, seed: (i, 0)),
        ),
        compiler_params=pltpu.CompilerParams(
            dimension_semantics=("parallel",)),    # steps independent -> 2 TCs on v7x
    )(seed_arr, ids_flat, table)

    if n_pad != n:
        out = out[:n]
    return out.reshape(*lead_shape, D)


class FlexibleInputLayerPallas:
    """Mirrors FlexibleInputLayer.forward control flow (non-cnn branch)."""

    def __init__(self, config, embedding_table):
        self.config = config
        self.table = embedding_table
        self.p = config['input_layer']['dropout']

    def __call__(self, inputs, training=False, seed=0, **kwargs):
        bidirectional = self.config['rnn_layer']['bidirectional']
        if isinstance(inputs, tuple):
            assert len(inputs) == 2
            fwd, bwd = inputs
            assert fwd.shape == bwd.shape
            # Fuse both directions into ONE pallas_call; global row indices
            # feed the dropout hash, so the directions get disjoint streams.
            stacked = jnp.stack([fwd, bwd], axis=0)
            emb = embedding_with_dropout(stacked, self.table, p=self.p,
                                         training=training, seed=seed)
            emb_fwd, emb_bwd = emb[0], emb[1]
            embedded = (emb_fwd, emb_bwd) if bidirectional else emb_fwd
        else:
            embedded = embedding_with_dropout(inputs, self.table, p=self.p,
                                              training=training, seed=seed)
        # `.cuda()` in the reference is a device transfer; arrays already live
        # on the accelerator here, so it is a no-op.
        kwargs['embedded'] = embedded
        return kwargs


if __name__ == "__main__":
    # Small deterministic setup. D=128 keeps the output block lane-dense.
    B, T = 2, 8           # batch, sequence length
    V, D = 256, 128       # vocab size, embedding dim

    key = jax.random.PRNGKey(0)
    k_ids, k_ids2, k_tab = jax.random.split(key, 3)

    ids_fwd = jax.random.randint(k_ids, (B, T), 0, V, dtype=jnp.int32)
    ids_bwd = jax.random.randint(k_ids2, (B, T), 0, V, dtype=jnp.int32)
    table = jax.random.normal(k_tab, (V, D), dtype=jnp.float32)

    config = {
        'input_layer': {'name': 'token', 'dropout': 0.5},
        'rnn_layer': {'bidirectional': True},
    }
    layer = FlexibleInputLayerPallas(config, table)

    # --- eval mode (dropout is identity): exact gather semantics ------------
    out_eval = jax.block_until_ready(layer(ids_fwd, training=False)['embedded'])
    ref_fwd = jnp.take(table, ids_fwd.reshape(-1), axis=0).reshape(B, T, D)
    assert out_eval.shape == (B, T, D)
    assert jnp.allclose(out_eval, ref_fwd, atol=1e-5), "embedding gather mismatch"

    # --- training mode, bidirectional tuple input: dropout path -------------
    out_train = layer((ids_fwd, ids_bwd), training=True, seed=123)['embedded']
    out_train = jax.block_until_ready(out_train)
    assert isinstance(out_train, tuple) and len(out_train) == 2
    assert out_train[0].shape == (B, T, D) and out_train[1].shape == (B, T, D)

    p = config['input_layer']['dropout']
    ref_bwd = jnp.take(table, ids_bwd.reshape(-1), axis=0).reshape(B, T, D)
    for out_dir, ref_dir in ((out_train[0], ref_fwd), (out_train[1], ref_bwd)):
        scaled = ref_dir / (1.0 - p)
        ok = jnp.isclose(out_dir, scaled, atol=1e-4, rtol=1e-4) | (out_dir == 0.0)
        assert bool(jnp.all(ok)), "dropout output inconsistent with scaling"
        drop_frac = float(jnp.mean(out_dir == 0.0))
        assert 0.35 < drop_frac < 0.65, f"drop fraction {drop_frac} far from p={p}"
    # the two directions must not share a dropout mask
    assert not bool(jnp.all((out_train[0] == 0.0) == (out_train[1] == 0.0))), \
        "fwd/bwd dropout masks identical (stream overlap)"

    print("KERNEL_OK")
</pallas_src>

<mosaic_0001>
module attributes {stable_mosaic.version = 11 : i64} {
  func.func @_embed_dropout_kernel(%arg0: i32, %arg1: memref<1xi32, #tpu.memory_space<smem>>, %arg2: memref<16x1xi32, #tpu.memory_space<vmem>>, %arg3: memref<256x128xf32, #tpu.memory_space<vmem>>, %arg4: memref<16x128xf32, #tpu.memory_space<vmem>>) attributes {dimension_semantics = [#tpu.dimension_semantics<parallel>], iteration_bounds = array<i64: 1>, scalar_prefetch = 1 : i64, scratch_operands = 0 : i64, tpu.core_type = #tpu.core_type<tc>, window_params = [{transform_indices = @transform_0, window_bounds = array<i64: 16, 1>}, {pipeline_mode = #tpu.pipeline_mode<synchronous>, transform_indices = @transform_1, window_bounds = array<i64: 256, 128>}, {transform_indices = @transform_2, window_bounds = array<i64: 16, 128>}]} {
    %c0 = arith.constant 0 : index
    %c0_0 = arith.constant 0 : index
    %0 = vector.load %arg2[%c0, %c0_0] : memref<16x1xi32, #tpu.memory_space<vmem>>, vector<16x1xi32>
    %1 = tpu.iota {dimensions = array<i32: 1>} : vector<16x256xi32>
    %2 = vector.broadcast %0 : vector<16x1xi32> to vector<16x256xi32>
    %3 = arith.cmpi eq, %2, %1 : vector<16x256xi32>
    %4 = arith.extui %3 : vector<16x256xi1> to vector<16x256xi32>
    %5 = arith.sitofp %4 : vector<16x256xi32> to vector<16x256xf32>
    %c0_1 = arith.constant 0 : index
    %c0_2 = arith.constant 0 : index
    %6 = vector.load %arg3[%c0_1, %c0_2] : memref<256x128xf32, #tpu.memory_space<vmem>>, vector<256x128xf32>
    %cst = arith.constant dense<0.000000e+00> : vector<16x128xf32>
    %7 = tpu.matmul %5, %6, %cst {dimension_numbers = #tpu.dot_dimension_numbers<[1], [0], [0], [1], [0, 0, 1, 1], [], []>} : vector<16x256xf32>, vector<256x128xf32>, vector<16x128xf32> -> vector<16x128xf32>
    %c0_3 = arith.constant 0 : index
    %c0_4 = arith.constant 0 : index
    %8 = vector.load %arg4[%c0_3, %c0_4] : memref<16x128xf32, #tpu.memory_space<vmem>>, vector<16x128xf32>
    tpu.vector_store %arg4[%c0_3, %c0_4], %7 {strides = array<i32>} : memref<16x128xf32, #tpu.memory_space<vmem>>, vector<16x128xf32>,
    return
  }
  func.func @transform_0(%arg0: i32, %arg1: memref<1xi32, #tpu.memory_space<smem>>) -> (i32, i32) {
    %c0_i32 = arith.constant 0 : i32
    %c0_i32_0 = arith.constant 0 : i32
    return %arg0, %c0_i32 : i32, i32
  }
  func.func @transform_1(%arg0: i32, %arg1: memref<1xi32, #tpu.memory_space<smem>>) -> (i32, i32) {
    %c0_i32 = arith.constant 0 : i32
    %c0_i32_0 = arith.constant 0 : i32
    %c0_i32_1 = arith.constant 0 : i32
    return %c0_i32, %c0_i32_0 : i32, i32
  }
  func.func @transform_2(%arg0: i32, %arg1: memref<1xi32, #tpu.memory_space<smem>>) -> (i32, i32) {
    %c0_i32 = arith.constant 0 : i32
    %c0_i32_0 = arith.constant 0 : i32
    return %arg0, %c0_i32 : i32, i32
  }
}

</mosaic_0001>

<llo_original>
// kernel: tpu_custom_call.1
$region0: #{tpu_custom_call.1}
  #allocation0 [shape = 'u32[]', space=smem, size = 0x4, offset = 0x4, fixed_abs, tag = 'smem constant byte address 0x4 - core index']
  #allocation1 [shape = 'u32[144,128]{1,0:T(1,128)}', space=vmem, size = 0x12000, scoped, tag = 'internal scratch']
  #allocation2 [shape = 's32[1]{0}', space=sflag, size = 0x4, scoped, tag = 'scoped memory for tpu_custom_call.1']
  #allocation3 [shape = 's32[1]{0:T(128)S(6)}', space=smem, size = 0x200, scoped, tag = 'prefetched SMEM operand 0']
  %s0 = inlined_call_operand.<no memory space> [shape: s32[1], index: 0, kind: input, shape index: {}]
  %s1 = inlined_call_operand.vmem [shape: s32[16,1], index: 1, kind: input, shape index: {}]
  %s2 = inlined_call_operand.hbm [shape: f32[256,128], index: 2, kind: input, shape index: {}]
  %s3 = inlined_call_operand.hbm [shape: f32[16,128], index: 3, kind: output, shape index: {}]
  %s4 = sld [smem:[#allocation0]]
  $region22: #{tpu_custom_call.1} parent=0
    _
  %s6 = ssub.s32 1, %s4
  %s7 = scalar_select 0, %s6, %s4
  %8 = sst [smem:[#allocation3]] %s0
  $region1: #{tpu_custom_call.1} parent=0
    #allocation4 [shape = 'u8[131072]{0}', space=vmem, size = 0x20000, scoped, tag = 'input window, operand 2, single buffered']
    #allocation5 [shape = 's32[1]{0}', space=sflag, size = 0x4, scoped, tag = 'scoped memory for tpu_custom_call.1']
    #allocation6 [shape = 's32[1]{0}', space=sflag, size = 0x4, scoped, tag = 'scoped memory for tpu_custom_call.1']
    #allocation7 [shape = 'u8[8192]{0}', space=vmem, size = 0x2000, scoped, tag = 'output window, operand 0, single buffered']
    %9 = vsyncpa [#allocation5], 0
    %10 = vsyncpa [#allocation6], 0
    // Predicated region
    $region2: #{tpu_custom_call.1} parent=1 // pred_check
      _
    $region3: #{tpu_custom_call.1} parent=1 // pred_check_branch
      %12 = sbr.rel (0) target = $region5
    $region4: #{tpu_custom_call.1} parent=1 // pred_region
      _
    $region5: #{tpu_custom_call.1} parent=1 // pred_fallthru
      _
    // Predicated region
    $region6: #{tpu_custom_call.1} parent=1 // pred_check
      _
    $region7: #{tpu_custom_call.1} parent=1 // pred_check_branch
      %14 = sbr.rel (0) target = $region9
    $region8: #{tpu_custom_call.1} parent=1 // pred_region
      %s16 = ssub.s32 4096, 4096
      %17 = vsyncadd [#allocation5], %s16
      %s18 = sshll.u32 [#allocation4], 4
      %s19 = int_to_ptr.vmem [resolvable:$true] %s18
      %24 = dma.hbm_to_vmem [thread:$0]  %s2, 4096, %s19, [#allocation5], 128, 128, 8
    $region9: #{tpu_custom_call.1} parent=1 // pred_fallthru
      _
    // Predicated region
    $region10: #{tpu_custom_call.1} parent=1 // pred_check
      _
    $region11: #{tpu_custom_call.1} parent=1 // pred_check_branch
      %26 = sbr.rel (0) target = $region13
    $region12: #{tpu_custom_call.1} parent=1 // pred_region
      %27 = dma.done [#allocation5], 4096
    $region13: #{tpu_custom_call.1} parent=1 // pred_fallthru
      _
    %v28 = vld [vmem:[%s1] sm:$0xff]
    %v29 = vld [vmem:[%s1 + $0x8] sm:$0xff]
    %v30 = vlaneseq
    %v31 = vand.u32 %v30, 127
    %v32 = vadd.s32 %v31, 128
    %33 = vset.pattern.permute.xlu0 0
    %34 = vperm.xlu0 %33, %v28
    %v35 = vpop.permute.xlu0 %34
    %36 = vset.pattern.permute.xlu0 0
    %37 = vperm.xlu0 %36, %v29
    %v38 = vpop.permute.xlu0 %37
    %vm39 = vcmp.eq.s32.totalorder %v35, %v31
    %vm40 = vcmp.eq.s32.totalorder %v35, %v32
    %vm41 = vcmp.eq.s32.totalorder %v38, %v31
    %vm42 = vcmp.eq.s32.totalorder %v38, %v32
    %v43 = vsel %vm39, 1, 0
    %v44 = vsel %vm40, 1, 0
    %v45 = vsel %vm41, 1, 0
    %v46 = vsel %vm42, 1, 0
    %v47 = vcvt.s32.f32 %v43
    %v48 = vcvt.s32.f32 %v44
    %v49 = vcvt.s32.f32 %v45
    %v50 = vcvt.s32.f32 %v46
    %v51 = vld [vmem:[#allocation4] sm:$0xff]
    %v52 = vld [vmem:[#allocation4 + $0x8] sm:$0xff]
    %v53 = vld [vmem:[#allocation4 + $0x10] sm:$0xff]
    %v54 = vld [vmem:[#allocation4 + $0x18] sm:$0xff]
    %v55 = vld [vmem:[#allocation4 + $0x20] sm:$0xff]
    %v56 = vld [vmem:[#allocation4 + $0x28] sm:$0xff]
    %v57 = vld [vmem:[#allocation4 + $0x30] sm:$0xff]
    %v58 = vld [vmem:[#allocation4 + $0x38] sm:$0xff]
    %v59 = vld [vmem:[#allocation4 + $0x40] sm:$0xff]
    %v60 = vld [vmem:[#allocation4 + $0x48] sm:$0xff]
    %v61 = vld [vmem:[#allocation4 + $0x50] sm:$0xff]
    %v62 = vld [vmem:[#allocation4 + $0x58] sm:$0xff]
    %v63 = vld [vmem:[#allocation4 + $0x60] sm:$0xff]
    %v64 = vld [vmem:[#allocation4 + $0x68] sm:$0xff]
    %v65 = vld [vmem:[#allocation4 + $0x70] sm:$0xff]
    %v66 = vld [vmem:[#allocation4 + $0x78] sm:$0xff]
    %v67 = vld [vmem:[#allocation4 + $0x80] sm:$0xff]
    %v68 = vld [vmem:[#allocation4 + $0x88] sm:$0xff]
    %v69 = vld [vmem:[#allocation4 + $0x90] sm:$0xff]
    %v70 = vld [vmem:[#allocation4 + $0x98] sm:$0xff]
    %v71 = vld [vmem:[#allocation4 + $0xa0] sm:$0xff]
    %v72 = vld [vmem:[#allocation4 + $0xa8] sm:$0xff]
    %v73 = vld [vmem:[#allocation4 + $0xb0] sm:$0xff]
    %v74 = vld [vmem:[#allocation4 + $0xb8] sm:$0xff]
    %v75 = vld [vmem:[#allocation4 + $0xc0] sm:$0xff]
    %v76 = vld [vmem:[#allocation4 + $0xc8] sm:$0xff]
    %v77 = vld [vmem:[#allocation4 + $0xd0] sm:$0xff]
    %v78 = vld [vmem:[#allocation4 + $0xd8] sm:$0xff]
    %v79 = vld [vmem:[#allocation4 + $0xe0] sm:$0xff]
    %v80 = vld [vmem:[#allocation4 + $0xe8] sm:$0xff]
    %v81 = vld [vmem:[#allocation4 + $0xf0] sm:$0xff]
    %v82 = vld [vmem:[#allocation4 + $0xf8] sm:$0xff]
    %83 = vmatprep.subr.mxu0 0.0
    %84 = vmatpush1.msra.mxu0 %v66
    %85 = vmatprep.subr.mxu0 0.0
    %86 = vmatpush1.msra.mxu0 %v65
    %87 = vmatprep.subr.mxu0 0.0
    %88 = vmatpush1.msra.mxu0 %v64
    %89 = vmatprep.subr.mxu0 0.0
    %90 = vmatpush1.msra.mxu0 %v63
    %91 = vmatprep.subr.mxu0 0.0
    %92 = vmatpush1.msra.mxu0 %v62
    %93 = vmatprep.subr.mxu0 0.0
    %94 = vmatpush1.msra.mxu0 %v61
    %95 = vmatprep.subr.mxu0 0.0
    %96 = vmatpush1.msra.mxu0 %v60
    %97 = vmatprep.subr.mxu0 0.0
    %98 = vmatpush1.msra.mxu0 %v59
    %99 = vmatprep.subr.mxu0 0.0
    %100 = vmatpush1.msra.mxu0 %v58
    %101 = vmatprep.subr.mxu0 0.0
    %102 = vmatpush1.msra.mxu0 %v57
    %103 = vmatprep.subr.mxu0 0.0
    %104 = vmatpush1.msra.mxu0 %v56
    %105 = vmatprep.subr.mxu0 0.0
    %106 = vmatpush1.msra.mxu0 %v55
    %107 = vmatprep.subr.mxu0 0.0
    %108 = vmatpush1.msra.mxu0 %v54
    %109 = vmatprep.subr.mxu0 0.0
    %110 = vmatpush1.msra.mxu0 %v53
    %111 = vmatprep.subr.mxu0 0.0
    %112 = vmatpush1.msra.mxu0 %v52
    %113 = vmatprep.subr.mxu0 0.0
    %114 = vmatpush1.msra.mxu0 %v51
    %115 = vmatprep.subr.mxu0 0.0
    %116 = vmatpush2.msra.mxu0 %v82
    %117 = vmatprep.subr.mxu0 0.0
    %118 = vmatpush2.msra.mxu0 %v81
    %119 = vmatprep.subr.mxu0 0.0
    %120 = vmatpush2.msra.mxu0 %v80
    %121 = vmatprep.subr.mxu0 0.0
    %122 = vmatpush2.msra.mxu0 %v79
    %123 = vmatprep.subr.mxu0 0.0
    %124 = vmatpush2.msra.mxu0 %v78
    %125 = vmatprep.subr.mxu0 0.0
    %126 = vmatpush2.msra.mxu0 %v77
    %127 = vmatprep.subr.mxu0 0.0
    %128 = vmatpush2.msra.mxu0 %v76
    %129 = vmatprep.subr.mxu0 0.0
    %130 = vmatpush2.msra.mxu0 %v75
    %131 = vmatprep.subr.mxu0 0.0
    %132 = vmatpush2.msra.mxu0 %v74
    %133 = vmatprep.subr.mxu0 0.0
    %134 = vmatpush2.msra.mxu0 %v73
    %135 = vmatprep.subr.mxu0 0.0
    %136 = vmatpush2.msra.mxu0 %v72
    %137 = vmatprep.subr.mxu0 0.0
    %138 = vmatpush2.msra.mxu0 %v71
    %139 = vmatprep.subr.mxu0 0.0
    %140 = vmatpush2.msra.mxu0 %v70
    %141 = vmatprep.subr.mxu0 0.0
    %142 = vmatpush2.msra.mxu0 %v69
    %143 = vmatprep.subr.mxu0 0.0
    %144 = vmatpush2.msra.mxu0 %v68
    %145 = vmatprep.subr.mxu0 0.0
    %146 = vmatpush2.msra.mxu0 %v67
    %147 = vmatprep.mubr.f32.mxu0 %v48
    %148 = vmatmul.mubr.f32.gmra.mxu0 %v47
    %v149 = vpop.f32.mrf.mxu0
    %v150 = vadd.f32 0.0, %v149
    %v151 = vpop.f32.mrf.mxu0
    %152 = vmatprep.mubr.f32.mxu0 %v50
    %153 = vmatmul.mubr.f32.gmra.mxu0 %v49
    %v154 = vpop.f32.mrf.mxu0
    %v155 = vadd.f32 0.0, %v154
    %v156 = vpop.f32.mrf.mxu0
    %157 = vdwg.mxu0
    %158 = vst [vmem:[#allocation7] sm:$0xff] %v150
    %159 = vst [vmem:[#allocation7 + $0x8] sm:$0xff] %v155
    // Predicated region
    $region14: #{tpu_custom_call.1} parent=1 // pred_check
      _
    $region15: #{tpu_custom_call.1} parent=1 // pred_check_branch
      %161 = sbr.rel (0) target = $region17
    $region16: #{tpu_custom_call.1} parent=1 // pred_region
      %s163 = ssub.s32 256, 256
      %164 = vsyncadd [#allocation6], %s163
      %s165 = sshll.u32 [#allocation7], 4
      %s166 = int_to_ptr.vmem [resolvable:$true] %s165
      %171 = dma.vmem_to_hbm [thread:$0]  %s166, 256, %s3, [#allocation6], 128, 128, 8
    $region17: #{tpu_custom_call.1} parent=1 // pred_fallthru
      _
    // Predicated region
    $region18: #{tpu_custom_call.1} parent=1 // pred_check
      _
    $region19: #{tpu_custom_call.1} parent=1 // pred_check_branch
      %173 = sbr.rel (0) target = $region21
    $region20: #{tpu_custom_call.1} parent=1 // pred_region
      %174 = dma.done [#allocation6], 256
    $region21: #{tpu_custom_call.1} parent=1 // pred_fallthru
      _
    %175 = vsyncpa [#allocation5], 1
    %176 = vsyncpa [#allocation6], 1

</llo_original>
